<compile_context>
chip_gen: v6e
topology: v6e:2x2x1
jax: 0.10.0
libtpu: 0.0.40
codegen_flags: <defaults>
</compile_context>

<pallas_src>
import functools

import jax
import jax.numpy as jnp
from jax.experimental import pallas as pl
from jax.experimental.pallas import tpu as pltpu

LANES = 128
MAX_BLK_ROWS = 4096          # 4096 x 128 x 4 B = 2 MiB per f32 input block
VMEM_LIMIT_BYTES = 32 * 1024 * 1024


def _sigmoid(x):
    # sigmoid(x) == 0.5 * (tanh(x / 2) + 1): one EUP op + 2 cheap VALU ops,
    # avoids the exact f32 divide of 1/(1+exp(-x)).
    return 0.5 * (jnp.tanh(0.5 * x) + 1.0)


def _dice_sums_kernel(p_ref, t_ref, out_ref, acc_ref, *,
                      num_blocks, blocks_per_core, rows_rem, sub,
                      has_overshoot):
    """Accumulates sublane-shaped partial sums of sigmoid(p)*t, sigmoid(p), t."""
    c = pl.program_id(0)                      # core-split axis
    i = pl.program_id(1)                      # streaming axis
    g = c * blocks_per_core + i               # global block index (may overshoot)

    @pl.when(i == 0)
    def _init():
        acc_ref[...] = jnp.zeros_like(acc_ref)

    def _psum(x):
        # (block_rows, LANES) -> (sub, LANES): stays on the VPU (no XLU
        # cross-sublane reduce) when sub == 8.
        if sub == 8:
            return jnp.sum(x.reshape(-1, 8, LANES), axis=0)
        return jnp.sum(x, axis=0, keepdims=True)

    def _accum(valid_rows):
        p = p_ref[...].astype(jnp.float32)
        t = t_ref[...].astype(jnp.float32)
        s = _sigmoid(p)
        if valid_rows is not None:            # only emitted for the partial block
            row = jax.lax.broadcasted_iota(jnp.int32, p.shape, 0)
            keep = row < valid_rows
            s = jnp.where(keep, s, 0.0)
            t = jnp.where(keep, t, 0.0)
        acc_ref[0] += _psum(s * t)
        acc_ref[1] += _psum(s)
        acc_ref[2] += _psum(t)

    if rows_rem > 0:
        # Unmasked fast path for every full block ...
        @pl.when(g < num_blocks - 1)
        def _full():
            _accum(None)

        # ... masked path only for the single partial last block.
        @pl.when(g == num_blocks - 1)
        def _partial():
            _accum(rows_rem)
    elif has_overshoot:
        # Ceil split across cores: skip the clamped duplicate block on core 1.
        @pl.when(g < num_blocks)
        def _full():
            _accum(None)
    else:
        _accum(None)

    @pl.when(i == blocks_per_core - 1)
    def _finalize():
        # Single 8 -> 1 cross-sublane reduce + lane-dense (3, 1, 128) store.
        out_ref[...] = jnp.sum(acc_ref[...], axis=1, keepdims=True)


@functools.partial(jax.jit, static_argnames=("smooth", "core_parallel"))
def _dice_loss_impl(predictions, targets, *, smooth, core_parallel):
    n = predictions.size
    p = predictions.reshape(-1)
    t = targets.reshape(-1)

    n_rows = n // LANES          # full 128-wide rows handled by the kernel
    tail = n - n_rows * LANES    # < 128 leftover elements (plain JAX)

    if tail:
        s_tail = _sigmoid(p[n_rows * LANES:].astype(jnp.float32))
        t_tail = t[n_rows * LANES:].astype(jnp.float32)
        tail_sums = jnp.stack(
            [jnp.sum(s_tail * t_tail), jnp.sum(s_tail), jnp.sum(t_tail)])
    else:
        tail_sums = jnp.zeros((3,), jnp.float32)

    if n_rows == 0:
        inter, psum, tsum = tail_sums[0], tail_sums[1], tail_sums[2]
    else:
        if tail == 0:
            # Metadata-only reshape: no HBM copy.
            p2 = p.reshape(n_rows, LANES)
            t2 = t.reshape(n_rows, LANES)
            allow_fusion = None
        else:
            # Non-128-aligned: prefix slice; allow XLA to fuse it into the
            # kernel's input DMA so the extra HBM pass can be elided.
            p2 = p[: n_rows * LANES].reshape(n_rows, LANES)
            t2 = t[: n_rows * LANES].reshape(n_rows, LANES)
            allow_fusion = [True, True]

        block_rows = min(MAX_BLK_ROWS, n_rows)
        num_blocks = (n_rows + block_rows - 1) // block_rows
        rows_rem = n_rows % block_rows          # >0 => last block is partial

        # Always split the block range 2-way (ceil split) when there is more
        # than one block; CORE_PARALLEL shards it across the two v7x TCs.
        n_par = 2 if num_blocks >= 2 else 1
        bpp = (num_blocks + n_par - 1) // n_par
        has_overshoot = n_par * bpp > num_blocks

        sub = 8 if block_rows % 8 == 0 else 1

        sem0 = (pltpu.CORE_PARALLEL
                if (core_parallel and n_par > 1) else pltpu.PARALLEL)

        if has_overshoot:
            in_map = lambda c, i: (jnp.minimum(c * bpp + i, num_blocks - 1), 0)
        else:
            in_map = lambda c, i: (c * bpp + i, 0)

        kernel = functools.partial(
            _dice_sums_kernel,
            num_blocks=num_blocks, blocks_per_core=bpp, rows_rem=rows_rem,
            sub=sub, has_overshoot=has_overshoot)

        partials = pl.pallas_call(
            kernel,
            out_shape=jax.ShapeDtypeStruct((n_par, 3, 1, LANES), jnp.float32),
            grid=(n_par, bpp),
            in_specs=[
                pl.BlockSpec((block_rows, LANES), in_map),
                pl.BlockSpec((block_rows, LANES), in_map),
            ],
            out_specs=pl.BlockSpec((None, 3, 1, LANES),
                                   lambda c, i: (c, 0, 0, 0)),
            scratch_shapes=[pltpu.VMEM((3, sub, LANES), jnp.float32)],
            compiler_params=pltpu.CompilerParams(
                dimension_semantics=(sem0, pltpu.ARBITRARY),
                vmem_limit_bytes=VMEM_LIMIT_BYTES,
                allow_input_fusion=allow_fusion),
        )(p2, t2)

        sums = jnp.sum(partials, axis=(0, 2, 3)) + tail_sums
        inter, psum, tsum = sums[0], sums[1], sums[2]

    dice = (2.0 * inter + smooth) / (psum + tsum + smooth)
    return 1.0 - dice


def dice_loss(predictions, targets, smooth=1e-5):
    # Prefer true 2-TensorCore sharding (v7x); fall back transparently if this
    # chip generation's Mosaic rejects CORE_PARALLEL.
    try:
        return _dice_loss_impl(predictions, targets,
                               smooth=float(smooth), core_parallel=True)
    except Exception:
        return _dice_loss_impl(predictions, targets,
                               smooth=float(smooth), core_parallel=False)


def _dice_loss_ref(predictions, targets, smooth=1e-5):
    p = jax.nn.sigmoid(predictions.astype(jnp.float32)).reshape(-1)
    t = targets.reshape(-1).astype(jnp.float32)
    inter = jnp.sum(p * t)
    dice = (2.0 * inter + smooth) / (jnp.sum(p) + jnp.sum(t) + smooth)
    return 1.0 - dice


if __name__ == "__main__":
    key = jax.random.PRNGKey(0)
    kp, kt = jax.random.split(key)
    # logits (NCHW) and binary targets
    predictions = jax.random.normal(kp, (2, 4, 16, 16), dtype=jnp.float32)
    targets = (jax.random.uniform(kt, (2, 4, 16, 16)) > 0.5).astype(jnp.float32)

    loss = dice_loss(predictions, targets)
    jax.block_until_ready(loss)

    ref = _dice_loss_ref(predictions, targets)
    assert jnp.allclose(loss, ref, rtol=1e-4, atol=1e-5), (loss, ref)

    print("KERNEL_OK")
</pallas_src>

<mosaic_0001>
module attributes {stable_mosaic.version = 11 : i64} {
  func.func @_dice_sums_kernel(%arg0: i32, %arg1: i32, %arg2: memref<16x128xf32, #tpu.memory_space<vmem>>, %arg3: memref<16x128xf32, #tpu.memory_space<vmem>>, %arg4: memref<1x3x1x128xf32, #tpu.memory_space<vmem>>, %arg5: memref<3x8x128xf32, #tpu.memory_space<vmem>>) attributes {dimension_semantics = [#tpu.dimension_semantics<parallel>, #tpu.dimension_semantics<arbitrary>], iteration_bounds = array<i64: 1, 1>, scalar_prefetch = 0 : i64, scratch_operands = 1 : i64, tpu.core_type = #tpu.core_type<tc>, window_params = [{transform_indices = @transform_0, window_bounds = array<i64: 16, 128>}, {transform_indices = @transform_1, window_bounds = array<i64: 16, 128>}, {transform_indices = @transform_2, window_bounds = array<i64: 1, 3, 1, 128>}]} {
    %c0_i32 = arith.constant 0 : i32
    %0 = arith.cmpi eq, %arg1, %c0_i32 : i32
    %1 = arith.extui %0 : i1 to i32
    %c0_i32_0 = arith.constant 0 : i32
    %2 = arith.cmpi ne, %1, %c0_i32_0 : i32
    scf.if %2 {
      %cst_27 = arith.constant 0.000000e+00 : f32
      %40 = vector.broadcast %cst_27 : f32 to vector<3x8x128xf32>
      %c0_28 = arith.constant 0 : index
      %c0_29 = arith.constant 0 : index
      %c0_30 = arith.constant 0 : index
      %41 = vector.load %arg5[%c0_28, %c0_29, %c0_30] : memref<3x8x128xf32, #tpu.memory_space<vmem>>, vector<3x8x128xf32>
      tpu.vector_store %arg5[%c0_28, %c0_29, %c0_30], %40 {strides = array<i32>} : memref<3x8x128xf32, #tpu.memory_space<vmem>>, vector<3x8x128xf32>,
    } else {
    }
    %c0 = arith.constant 0 : index
    %c0_1 = arith.constant 0 : index
    %3 = vector.load %arg2[%c0, %c0_1] : memref<16x128xf32, #tpu.memory_space<vmem>>, vector<16x128xf32>
    %c0_2 = arith.constant 0 : index
    %c0_3 = arith.constant 0 : index
    %4 = vector.load %arg3[%c0_2, %c0_3] : memref<16x128xf32, #tpu.memory_space<vmem>>, vector<16x128xf32>
    %cst = arith.constant 5.000000e-01 : f32
    %5 = vector.broadcast %cst : f32 to vector<16x128xf32>
    %6 = arith.mulf %5, %3 : vector<16x128xf32>
    %7 = math.tanh %6 : vector<16x128xf32>
    %cst_4 = arith.constant 1.000000e+00 : f32
    %8 = vector.broadcast %cst_4 : f32 to vector<16x128xf32>
    %9 = arith.addf %7, %8 : vector<16x128xf32>
    %cst_5 = arith.constant 5.000000e-01 : f32
    %10 = vector.broadcast %cst_5 : f32 to vector<16x128xf32>
    %11 = arith.mulf %10, %9 : vector<16x128xf32>
    %c0_6 = arith.constant 0 : index
    %c0_7 = arith.constant 0 : index
    %c0_8 = arith.constant 0 : index
    %12 = vector.load %arg5[%c0_6, %c0_7, %c0_8] : memref<3x8x128xf32, #tpu.memory_space<vmem>>, vector<1x8x128xf32>
    %13 = vector.shape_cast %12 : vector<1x8x128xf32> to vector<8x128xf32>
    %14 = arith.mulf %11, %4 : vector<16x128xf32>
    %15 = vector.shape_cast %14 : vector<16x128xf32> to vector<2x8x128xf32>
    %cst_9 = arith.constant dense<0.000000e+00> : vector<8x128xf32>
    %16 = vector.multi_reduction <add>, %15, %cst_9 [0] : vector<2x8x128xf32> to vector<8x128xf32>
    %17 = arith.addf %13, %16 : vector<8x128xf32>
    %c0_10 = arith.constant 0 : index
    %c0_11 = arith.constant 0 : index
    %c0_12 = arith.constant 0 : index
    %18 = vector.load %arg5[%c0_10, %c0_11, %c0_12] : memref<3x8x128xf32, #tpu.memory_space<vmem>>, vector<1x8x128xf32>
    %19 = vector.shape_cast %18 : vector<1x8x128xf32> to vector<8x128xf32>
    %20 = vector.shape_cast %17 : vector<8x128xf32> to vector<1x8x128xf32>
    tpu.vector_store %arg5[%c0_10, %c0_11, %c0_12], %20 {strides = array<i32>} : memref<3x8x128xf32, #tpu.memory_space<vmem>>, vector<1x8x128xf32>,
    %c1 = arith.constant 1 : index
    %c0_13 = arith.constant 0 : index
    %c0_14 = arith.constant 0 : index
    %21 = vector.load %arg5[%c1, %c0_13, %c0_14] : memref<3x8x128xf32, #tpu.memory_space<vmem>>, vector<1x8x128xf32>
    %22 = vector.shape_cast %21 : vector<1x8x128xf32> to vector<8x128xf32>
    %23 = vector.shape_cast %11 : vector<16x128xf32> to vector<2x8x128xf32>
    %cst_15 = arith.constant dense<0.000000e+00> : vector<8x128xf32>
    %24 = vector.multi_reduction <add>, %23, %cst_15 [0] : vector<2x8x128xf32> to vector<8x128xf32>
    %25 = arith.addf %22, %24 : vector<8x128xf32>
    %c1_16 = arith.constant 1 : index
    %c0_17 = arith.constant 0 : index
    %c0_18 = arith.constant 0 : index
    %26 = vector.load %arg5[%c1_16, %c0_17, %c0_18] : memref<3x8x128xf32, #tpu.memory_space<vmem>>, vector<1x8x128xf32>
    %27 = vector.shape_cast %26 : vector<1x8x128xf32> to vector<8x128xf32>
    %28 = vector.shape_cast %25 : vector<8x128xf32> to vector<1x8x128xf32>
    tpu.vector_store %arg5[%c1_16, %c0_17, %c0_18], %28 {strides = array<i32>} : memref<3x8x128xf32, #tpu.memory_space<vmem>>, vector<1x8x128xf32>,
    %c2 = arith.constant 2 : index
    %c0_19 = arith.constant 0 : index
    %c0_20 = arith.constant 0 : index
    %29 = vector.load %arg5[%c2, %c0_19, %c0_20] : memref<3x8x128xf32, #tpu.memory_space<vmem>>, vector<1x8x128xf32>
    %30 = vector.shape_cast %29 : vector<1x8x128xf32> to vector<8x128xf32>
    %31 = vector.shape_cast %4 : vector<16x128xf32> to vector<2x8x128xf32>
    %cst_21 = arith.constant dense<0.000000e+00> : vector<8x128xf32>
    %32 = vector.multi_reduction <add>, %31, %cst_21 [0] : vector<2x8x128xf32> to vector<8x128xf32>
    %33 = arith.addf %30, %32 : vector<8x128xf32>
    %c2_22 = arith.constant 2 : index
    %c0_23 = arith.constant 0 : index
    %c0_24 = arith.constant 0 : index
    %34 = vector.load %arg5[%c2_22, %c0_23, %c0_24] : memref<3x8x128xf32, #tpu.memory_space<vmem>>, vector<1x8x128xf32>
    %35 = vector.shape_cast %34 : vector<1x8x128xf32> to vector<8x128xf32>
    %36 = vector.shape_cast %33 : vector<8x128xf32> to vector<1x8x128xf32>
    tpu.vector_store %arg5[%c2_22, %c0_23, %c0_24], %36 {strides = array<i32>} : memref<3x8x128xf32, #tpu.memory_space<vmem>>, vector<1x8x128xf32>,
    %c0_i32_25 = arith.constant 0 : i32
    %37 = arith.cmpi eq, %arg1, %c0_i32_25 : i32
    %38 = arith.extui %37 : i1 to i32
    %c0_i32_26 = arith.constant 0 : i32
    %39 = arith.cmpi ne, %38, %c0_i32_26 : i32
    scf.if %39 {
      %c0_27 = arith.constant 0 : index
      %c0_28 = arith.constant 0 : index
      %c0_29 = arith.constant 0 : index
      %40 = vector.load %arg5[%c0_27, %c0_28, %c0_29] : memref<3x8x128xf32, #tpu.memory_space<vmem>>, vector<3x8x128xf32>
      %cst_30 = arith.constant dense<0.000000e+00> : vector<3x128xf32>
      %41 = vector.multi_reduction <add>, %40, %cst_30 [1] : vector<3x8x128xf32> to vector<3x128xf32>
      %42 = vector.shape_cast %41 : vector<3x128xf32> to vector<3x1x128xf32>
      %c0_31 = arith.constant 0 : index
      %c0_32 = arith.constant 0 : index
      %c0_33 = arith.constant 0 : index
      %c0_34 = arith.constant 0 : index
      %43 = vector.load %arg4[%c0_31, %c0_32, %c0_33, %c0_34] : memref<1x3x1x128xf32, #tpu.memory_space<vmem>>, vector<1x3x1x128xf32>
      %44 = vector.shape_cast %43 : vector<1x3x1x128xf32> to vector<3x1x128xf32>
      %45 = vector.shape_cast %42 : vector<3x1x128xf32> to vector<1x3x1x128xf32>
      tpu.vector_store %arg4[%c0_31, %c0_32, %c0_33, %c0_34], %45 {strides = array<i32>} : memref<1x3x1x128xf32, #tpu.memory_space<vmem>>, vector<1x3x1x128xf32>,
    } else {
    }
    return
  }
  func.func @transform_0(%arg0: i32, %arg1: i32) -> (i32, i32) {
    %c1_i32 = arith.constant 1 : i32
    %0 = arith.muli %arg0, %c1_i32 : i32
    %1 = arith.addi %0, %arg1 : i32
    %c0_i32 = arith.constant 0 : i32
    %c0_i32_0 = arith.constant 0 : i32
    return %1, %c0_i32 : i32, i32
  }
  func.func @transform_1(%arg0: i32, %arg1: i32) -> (i32, i32) {
    %c1_i32 = arith.constant 1 : i32
    %0 = arith.muli %arg0, %c1_i32 : i32
    %1 = arith.addi %0, %arg1 : i32
    %c0_i32 = arith.constant 0 : i32
    %c0_i32_0 = arith.constant 0 : i32
    return %1, %c0_i32 : i32, i32
  }
  func.func @transform_2(%arg0: i32, %arg1: i32) -> (i32, i32, i32, i32) {
    %c0_i32 = arith.constant 0 : i32
    %c0_i32_0 = arith.constant 0 : i32
    %c0_i32_1 = arith.constant 0 : i32
    %c0_i32_2 = arith.constant 0 : i32
    return %arg0, %c0_i32, %c0_i32_0, %c0_i32_1 : i32, i32, i32, i32
  }
}

module attributes {stable_mosaic.version = 11 : i64} {
  func.func @_dice_sums_kernel(%arg0: i32, %arg1: i32, %arg2: memref<16x128xf32, #tpu.memory_space<vmem>>, %arg3: memref<16x128xf32, #tpu.memory_space<vmem>>, %arg4: memref<1x3x1x128xf32, #tpu.memory_space<vmem>>, %arg5: memref<3x8x128xf32, #tpu.memory_space<vmem>>) attributes {dimension_semantics = [#tpu.dimension_semantics<parallel>, #tpu.dimension_semantics<arbitrary>], iteration_bounds = array<i64: 1, 1>, scalar_prefetch = 0 : i64, scratch_operands = 1 : i64, tpu.core_type = #tpu.core_type<tc>, window_params = [{transform_indices = @transform_0, window_bounds = array<i64: 16, 128>}, {transform_indices = @transform_1, window_bounds = array<i64: 16, 128>}, {transform_indices = @transform_2, window_bounds = array<i64: 1, 3, 1, 128>}]} {
    %c0_i32 = arith.constant 0 : i32
    %0 = arith.cmpi eq, %arg1, %c0_i32 : i32
    %1 = arith.extui %0 : i1 to i32
    %c0_i32_0 = arith.constant 0 : i32
    %2 = arith.cmpi ne, %1, %c0_i32_0 : i32
    scf.if %2 {
      %cst_27 = arith.constant 0.000000e+00 : f32
      %40 = vector.broadcast %cst_27 : f32 to vector<3x8x128xf32>
      %c0_28 = arith.constant 0 : index
      %c0_29 = arith.constant 0 : index
      %c0_30 = arith.constant 0 : index
      %41 = vector.load %arg5[%c0_28, %c0_29, %c0_30] : memref<3x8x128xf32, #tpu.memory_space<vmem>>, vector<3x8x128xf32>
      tpu.vector_store %arg5[%c0_28, %c0_29, %c0_30], %40 {strides = array<i32>} : memref<3x8x128xf32, #tpu.memory_space<vmem>>, vector<3x8x128xf32>,
    } else {
    }
    %c0 = arith.constant 0 : index
    %c0_1 = arith.constant 0 : index
    %3 = vector.load %arg2[%c0, %c0_1] : memref<16x128xf32, #tpu.memory_space<vmem>>, vector<16x128xf32>
    %c0_2 = arith.constant 0 : index
    %c0_3 = arith.constant 0 : index
    %4 = vector.load %arg3[%c0_2, %c0_3] : memref<16x128xf32, #tpu.memory_space<vmem>>, vector<16x128xf32>
    %cst = arith.constant 5.000000e-01 : f32
    %5 = vector.broadcast %cst : f32 to vector<16x128xf32>
    %6 = arith.mulf %5, %3 : vector<16x128xf32>
    %7 = math.tanh %6 : vector<16x128xf32>
    %cst_4 = arith.constant 1.000000e+00 : f32
    %8 = vector.broadcast %cst_4 : f32 to vector<16x128xf32>
    %9 = arith.addf %7, %8 : vector<16x128xf32>
    %cst_5 = arith.constant 5.000000e-01 : f32
    %10 = vector.broadcast %cst_5 : f32 to vector<16x128xf32>
    %11 = arith.mulf %10, %9 : vector<16x128xf32>
    %c0_6 = arith.constant 0 : index
    %c0_7 = arith.constant 0 : index
    %c0_8 = arith.constant 0 : index
    %12 = vector.load %arg5[%c0_6, %c0_7, %c0_8] : memref<3x8x128xf32, #tpu.memory_space<vmem>>, vector<1x8x128xf32>
    %13 = vector.shape_cast %12 : vector<1x8x128xf32> to vector<8x128xf32>
    %14 = arith.mulf %11, %4 : vector<16x128xf32>
    %15 = vector.shape_cast %14 : vector<16x128xf32> to vector<2x8x128xf32>
    %cst_9 = arith.constant dense<0.000000e+00> : vector<8x128xf32>
    %16 = vector.multi_reduction <add>, %15, %cst_9 [0] : vector<2x8x128xf32> to vector<8x128xf32>
    %17 = arith.addf %13, %16 : vector<8x128xf32>
    %c0_10 = arith.constant 0 : index
    %c0_11 = arith.constant 0 : index
    %c0_12 = arith.constant 0 : index
    %18 = vector.load %arg5[%c0_10, %c0_11, %c0_12] : memref<3x8x128xf32, #tpu.memory_space<vmem>>, vector<1x8x128xf32>
    %19 = vector.shape_cast %18 : vector<1x8x128xf32> to vector<8x128xf32>
    %20 = vector.shape_cast %17 : vector<8x128xf32> to vector<1x8x128xf32>
    tpu.vector_store %arg5[%c0_10, %c0_11, %c0_12], %20 {strides = array<i32>} : memref<3x8x128xf32, #tpu.memory_space<vmem>>, vector<1x8x128xf32>,
    %c1 = arith.constant 1 : index
    %c0_13 = arith.constant 0 : index
    %c0_14 = arith.constant 0 : index
    %21 = vector.load %arg5[%c1, %c0_13, %c0_14] : memref<3x8x128xf32, #tpu.memory_space<vmem>>, vector<1x8x128xf32>
    %22 = vector.shape_cast %21 : vector<1x8x128xf32> to vector<8x128xf32>
    %23 = vector.shape_cast %11 : vector<16x128xf32> to vector<2x8x128xf32>
    %cst_15 = arith.constant dense<0.000000e+00> : vector<8x128xf32>
    %24 = vector.multi_reduction <add>, %23, %cst_15 [0] : vector<2x8x128xf32> to vector<8x128xf32>
    %25 = arith.addf %22, %24 : vector<8x128xf32>
    %c1_16 = arith.constant 1 : index
    %c0_17 = arith.constant 0 : index
    %c0_18 = arith.constant 0 : index
    %26 = vector.load %arg5[%c1_16, %c0_17, %c0_18] : memref<3x8x128xf32, #tpu.memory_space<vmem>>, vector<1x8x128xf32>
    %27 = vector.shape_cast %26 : vector<1x8x128xf32> to vector<8x128xf32>
    %28 = vector.shape_cast %25 : vector<8x128xf32> to vector<1x8x128xf32>
    tpu.vector_store %arg5[%c1_16, %c0_17, %c0_18], %28 {strides = array<i32>} : memref<3x8x128xf32, #tpu.memory_space<vmem>>, vector<1x8x128xf32>,
    %c2 = arith.constant 2 : index
    %c0_19 = arith.constant 0 : index
    %c0_20 = arith.constant 0 : index
    %29 = vector.load %arg5[%c2, %c0_19, %c0_20] : memref<3x8x128xf32, #tpu.memory_space<vmem>>, vector<1x8x128xf32>
    %30 = vector.shape_cast %29 : vector<1x8x128xf32> to vector<8x128xf32>
    %31 = vector.shape_cast %4 : vector<16x128xf32> to vector<2x8x128xf32>
    %cst_21 = arith.constant dense<0.000000e+00> : vector<8x128xf32>
    %32 = vector.multi_reduction <add>, %31, %cst_21 [0] : vector<2x8x128xf32> to vector<8x128xf32>
    %33 = arith.addf %30, %32 : vector<8x128xf32>
    %c2_22 = arith.constant 2 : index
    %c0_23 = arith.constant 0 : index
    %c0_24 = arith.constant 0 : index
    %34 = vector.load %arg5[%c2_22, %c0_23, %c0_24] : memref<3x8x128xf32, #tpu.memory_space<vmem>>, vector<1x8x128xf32>
    %35 = vector.shape_cast %34 : vector<1x8x128xf32> to vector<8x128xf32>
    %36 = vector.shape_cast %33 : vector<8x128xf32> to vector<1x8x128xf32>
    tpu.vector_store %arg5[%c2_22, %c0_23, %c0_24], %36 {strides = array<i32>} : memref<3x8x128xf32, #tpu.memory_space<vmem>>, vector<1x8x128xf32>,
    %c0_i32_25 = arith.constant 0 : i32
    %37 = arith.cmpi eq, %arg1, %c0_i32_25 : i32
    %38 = arith.extui %37 : i1 to i32
    %c0_i32_26 = arith.constant 0 : i32
    %39 = arith.cmpi ne, %38, %c0_i32_26 : i32
    scf.if %39 {
      %c0_27 = arith.constant 0 : index
      %c0_28 = arith.constant 0 : index
      %c0_29 = arith.constant 0 : index
      %40 = vector.load %arg5[%c0_27, %c0_28, %c0_29] : memref<3x8x128xf32, #tpu.memory_space<vmem>>, vector<3x8x128xf32>
      %cst_30 = arith.constant dense<0.000000e+00> : vector<3x128xf32>
      %41 = vector.multi_reduction <add>, %40, %cst_30 [1] : vector<3x8x128xf32> to vector<3x128xf32>
      %42 = vector.shape_cast %41 : vector<3x128xf32> to vector<3x1x128xf32>
      %c0_31 = arith.constant 0 : index
      %c0_32 = arith.constant 0 : index
      %c0_33 = arith.constant 0 : index
      %c0_34 = arith.constant 0 : index
      %43 = vector.load %arg4[%c0_31, %c0_32, %c0_33, %c0_34] : memref<1x3x1x128xf32, #tpu.memory_space<vmem>>, vector<1x3x1x128xf32>
      %44 = vector.shape_cast %43 : vector<1x3x1x128xf32> to vector<3x1x128xf32>
      %45 = vector.shape_cast %42 : vector<3x1x128xf32> to vector<1x3x1x128xf32>
      tpu.vector_store %arg4[%c0_31, %c0_32, %c0_33, %c0_34], %45 {strides = array<i32>} : memref<1x3x1x128xf32, #tpu.memory_space<vmem>>, vector<1x3x1x128xf32>,
    } else {
    }
    return
  }
  func.func @transform_0(%arg0: i32, %arg1: i32) -> (i32, i32) {
    %c1_i32 = arith.constant 1 : i32
    %0 = arith.muli %arg0, %c1_i32 : i32
    %1 = arith.addi %0, %arg1 : i32
    %c0_i32 = arith.constant 0 : i32
    %c0_i32_0 = arith.constant 0 : i32
    return %1, %c0_i32 : i32, i32
  }
  func.func @transform_1(%arg0: i32, %arg1: i32) -> (i32, i32) {
    %c1_i32 = arith.constant 1 : i32
    %0 = arith.muli %arg0, %c1_i32 : i32
    %1 = arith.addi %0, %arg1 : i32
    %c0_i32 = arith.constant 0 : i32
    %c0_i32_0 = arith.constant 0 : i32
    return %1, %c0_i32 : i32, i32
  }
  func.func @transform_2(%arg0: i32, %arg1: i32) -> (i32, i32, i32, i32) {
    %c0_i32 = arith.constant 0 : i32
    %c0_i32_0 = arith.constant 0 : i32
    %c0_i32_1 = arith.constant 0 : i32
    %c0_i32_2 = arith.constant 0 : i32
    return %arg0, %c0_i32, %c0_i32_0, %c0_i32_1 : i32, i32, i32, i32
  }
}

</mosaic_0001>

<llo_original>
// kernel: _dice_loss_impl.1
$region0: #{_dice_loss_impl.1}
  #allocation0 [shape = 'u32[]', space=smem, size = 0x4, offset = 0x4, fixed_abs, tag = 'smem constant byte address 0x4 - core index']
  #allocation1 [shape = 'u32[144,128]{1,0:T(1,128)}', space=vmem, size = 0x12000, scoped, tag = 'internal scratch']
  #allocation2 [shape = 'f32[3,8,128]{2,1,0:T(8,128)}', space=vmem, size = 0x3000, scoped, tag = 'scratch operand']
  %s0 = inlined_call_operand.vmem [shape: f32[16,128], index: 0, kind: input, shape index: {}]
  %s1 = inlined_call_operand.vmem [shape: f32[16,128], index: 1, kind: input, shape index: {}]
  %s2 = inlined_call_operand.vmem [shape: f32[1,3,1,128], index: 2, kind: output, shape index: {}]
  %s3 = sld [smem:[#allocation0]]
  $region26: #{_dice_loss_impl.1} parent=0
    _
  %s5 = ssub.s32 1, %s3
  %s6 = scalar_select 0, %s5, %s3
  // Predicated region
  $region2: #{_dice_loss_impl.1} parent=0 // pred_check
    _
  $region3: #{_dice_loss_impl.1} parent=0 // pred_check_branch
    %8 = sbr.rel (0) target = $region5
  $region4: #{_dice_loss_impl.1} parent=0 // pred_region
    %s9 = sadd.s32 0, 0
    %s10 = smul.u32 2, %s9
    %p11 = scmp.lt.s32.totalorder %s10, 1
    %s12 = scalar_select %p11, %s10, 1
    %s13 = smul.addr %s12, 8
    %s14 = scalar_lea.vmem %s0, %s13
    %s15 = sadd.s32 0, 0
    %s16 = smul.u32 2, %s15
  $region5: #{_dice_loss_impl.1} parent=0 // pred_fallthru
    _
  // Predicated region
  $region6: #{_dice_loss_impl.1} parent=0 // pred_check
    _
  $region7: #{_dice_loss_impl.1} parent=0 // pred_check_branch
    %18 = sbr.rel (0) target = $region9
  $region8: #{_dice_loss_impl.1} parent=0 // pred_region
    %s19 = sadd.s32 0, 0
    %s20 = smul.u32 2, %s19
    %p21 = scmp.lt.s32.totalorder %s20, 1
    %s22 = scalar_select %p21, %s20, 1
    %s23 = smul.addr %s22, 8
    %s24 = scalar_lea.vmem %s1, %s23
    %s25 = sadd.s32 0, 0
    %s26 = smul.u32 2, %s25
  $region9: #{_dice_loss_impl.1} parent=0 // pred_fallthru
    _
  %s27 = sadd.s32 0, 0
  %s28 = smul.u32 2, %s27
  %p29 = scmp.lt.s32.totalorder %s28, 1
  %s30 = scalar_select %p29, %s28, 1
  %s31 = smul.addr %s30, 8
  %s32 = scalar_lea.vmem %s0, %s31
  %s33 = sadd.s32 0, 0
  %s34 = smul.u32 2, %s33
  %p35 = scmp.lt.s32.totalorder %s34, 1
  %s36 = scalar_select %p35, %s34, 1
  %s37 = smul.addr %s36, 8
  %s38 = scalar_lea.vmem %s1, %s37
  %s39 = sadd.s32 0, 0
  %s40 = smul.u32 2, %s39
  %p41 = scmp.lt.s32.totalorder %s40, 1
  %s42 = scalar_select %p41, %s40, 1
  %s43 = smul.addr %s42, 8
  %s44 = scalar_lea.vmem %s0, %s43
  %s45 = sadd.s32 0, 0
  %s46 = smul.u32 2, %s45
  %s47 = sadd.s32 0, 0
  %s48 = smul.u32 2, %s47
  %p49 = scmp.lt.s32.totalorder %s48, 1
  %s50 = scalar_select %p49, %s48, 1
  %s51 = smul.addr %s50, 8
  %s52 = scalar_lea.vmem %s1, %s51
  %s53 = sadd.s32 0, 0
  %s54 = smul.u32 2, %s53
  %p55 = scmp.eq.s32.totalorder 0, 0
  // Predicated region
  $region10: #{_dice_loss_impl.1} parent=0 // pred_check
    %p56 = pneg %p55
  $region11: #{_dice_loss_impl.1} parent=0 // pred_check_branch
    %58 = sbr.rel (%p56) target = $region13
  $region12: #{_dice_loss_impl.1} parent=0 // pred_region
    %59 = vst [vmem:[#allocation2] sm:$0xff] 0.0
    %60 = vst [vmem:[#allocation2 + $0x8] sm:$0xff] 0.0
    %61 = vst [vmem:[#allocation2 + $0x10] sm:$0xff] 0.0
  $region13: #{_dice_loss_impl.1} parent=0 // pred_fallthru
    _
  %v62 = vld [vmem:[%s44] sm:$0xff]
  %v63 = vld [vmem:[%s44 + $0x8] sm:$0xff]
  %v64 = vld [vmem:[%s52] sm:$0xff]
  %v65 = vld [vmem:[%s52 + $0x8] sm:$0xff]
  %v66 = vmul.f32 %v62, 0.5
  %v67 = vmul.f32 %v63, 0.5
  %v68 = vtanh.pop %v66
  %v69 = vtanh.pop %v67
  %v70 = vadd.f32 %v68, 1.0
  %v71 = vadd.f32 %v69, 1.0
  %v72 = vmul.f32 %v70, 0.5
  %v73 = vmul.f32 %v71, 0.5
  %v74 = vld [vmem:[#allocation2] sm:$0xff]
  %v75 = vmul.f32 %v72, %v64
  %v76 = vmul.f32 %v73, %v65
  %v77 = vadd.f32 %v75, %v76
  %v78 = vadd.f32 %v74, %v77
  %79 = vst [vmem:[#allocation2] sm:$0xff] %v78
  %s80 = scalar_lea.vmem [#allocation2], 8
  %v81 = vld [vmem:[%s80] sm:$0xff]
  %v82 = vadd.f32 %v72, %v73
  %v83 = vadd.f32 %v81, %v82
  %84 = vst [vmem:[%s80] sm:$0xff] %v83
  %s85 = scalar_lea.vmem [#allocation2], 16
  %v86 = vld [vmem:[%s85] sm:$0xff]
  %v87 = vadd.f32 %v64, %v65
  %v88 = vadd.f32 %v86, %v87
  %89 = vst [vmem:[%s85] sm:$0xff] %v88
  // Predicated region
  $region14: #{_dice_loss_impl.1} parent=0 // pred_check
    %p90 = pneg %p55
  $region15: #{_dice_loss_impl.1} parent=0 // pred_check_branch
    %92 = sbr.rel (%p90) target = $region17
  $region16: #{_dice_loss_impl.1} parent=0 // pred_region
    %v93 = vld [vmem:[#allocation2] sm:$0xff]
    %v94 = vld [vmem:[#allocation2 + $0x8] sm:$0xff]
    %v95 = vld [vmem:[#allocation2 + $0x10] sm:$0xff]
    %v96 = vrot.slane %v93, 4
    %v97 = vadd.f32 %v93, %v96
    %v98 = vrot.slane %v97, 2
    %v99 = vadd.f32 %v97, %v98
    %v100 = vrot.slane %v99, 1
    %v101 = vadd.f32 %v99, %v100
    %v102 = vrot.slane %v94, 4
    %v103 = vadd.f32 %v94, %v102
    %v104 = vrot.slane %v103, 2
    %v105 = vadd.f32 %v103, %v104
    %v106 = vrot.slane %v105, 1
    %v107 = vadd.f32 %v105, %v106
    %v108 = vrot.slane %v95, 4
    %v109 = vadd.f32 %v95, %v108
    %v110 = vrot.slane %v109, 2
    %v111 = vadd.f32 %v109, %v110
    %v112 = vrot.slane %v111, 1
    %v113 = vadd.f32 %v111, %v112
    %114 = vst [vmem:[%s2] sm:$0x1] %v101
    %115 = vst [vmem:[%s2 + $0x1] sm:$0x1] %v107
    %116 = vst [vmem:[%s2 + $0x2] sm:$0x1] %v113
  $region17: #{_dice_loss_impl.1} parent=0 // pred_fallthru
    _
  // Predicated region
  $region18: #{_dice_loss_impl.1} parent=0 // pred_check
    _
  $region19: #{_dice_loss_impl.1} parent=0 // pred_check_branch
    %118 = sbr.rel (0) target = $region21
  $region20: #{_dice_loss_impl.1} parent=0 // pred_region
    _
  $region21: #{_dice_loss_impl.1} parent=0 // pred_fallthru
    _
  // Predicated region
  $region22: #{_dice_loss_impl.1} parent=0 // pred_check
    _
  $region23: #{_dice_loss_impl.1} parent=0 // pred_check_branch
    %120 = sbr.rel (0) target = $region25
  $region24: #{_dice_loss_impl.1} parent=0 // pred_region
    _
  $region25: #{_dice_loss_impl.1} parent=0 // pred_fallthru
    _

// kernel: _dice_loss_impl.1
$region0: #{_dice_loss_impl.1}
  #allocation0 [shape = 'u32[]', space=smem, size = 0x4, offset = 0x4, fixed_abs, tag = 'smem constant byte address 0x4 - core index']
  #allocation1 [shape = 'u32[144,128]{1,0:T(1,128)}', space=vmem, size = 0x12000, scoped, tag = 'internal scratch']
  #allocation2 [shape = 'f32[3,8,128]{2,1,0:T(8,128)}', space=vmem, size = 0x3000, scoped, tag = 'scratch operand']
  %s0 = inlined_call_operand.vmem [shape: f32[16,128], index: 0, kind: input, shape index: {}]
  %s1 = inlined_call_operand.vmem [shape: f32[16,128], index: 1, kind: input, shape index: {}]
  %s2 = inlined_call_operand.vmem [shape: f32[1,3,1,128], index: 2, kind: output, shape index: {}]
  %s3 = sld [smem:[#allocation0]]
  $region26: #{_dice_loss_impl.1} parent=0
    _
  %s5 = ssub.s32 1, %s3
  %s6 = scalar_select 0, %s5, %s3
  // Predicated region
  $region2: #{_dice_loss_impl.1} parent=0 // pred_check
    _
  $region3: #{_dice_loss_impl.1} parent=0 // pred_check_branch
    %8 = sbr.rel (0) target = $region5
  $region4: #{_dice_loss_impl.1} parent=0 // pred_region
    %s9 = sadd.s32 0, 0
    %s10 = smul.u32 2, %s9
    %p11 = scmp.lt.s32.totalorder %s10, 1
    %s12 = scalar_select %p11, %s10, 1
    %s13 = smul.addr %s12, 8
    %s14 = scalar_lea.vmem %s0, %s13
    %s15 = sadd.s32 0, 0
    %s16 = smul.u32 2, %s15
  $region5: #{_dice_loss_impl.1} parent=0 // pred_fallthru
    _
  // Predicated region
  $region6: #{_dice_loss_impl.1} parent=0 // pred_check
    _
  $region7: #{_dice_loss_impl.1} parent=0 // pred_check_branch
    %18 = sbr.rel (0) target = $region9
  $region8: #{_dice_loss_impl.1} parent=0 // pred_region
    %s19 = sadd.s32 0, 0
    %s20 = smul.u32 2, %s19
    %p21 = scmp.lt.s32.totalorder %s20, 1
    %s22 = scalar_select %p21, %s20, 1
    %s23 = smul.addr %s22, 8
    %s24 = scalar_lea.vmem %s1, %s23
    %s25 = sadd.s32 0, 0
    %s26 = smul.u32 2, %s25
  $region9: #{_dice_loss_impl.1} parent=0 // pred_fallthru
    _
  %s27 = sadd.s32 0, 0
  %s28 = smul.u32 2, %s27
  %p29 = scmp.lt.s32.totalorder %s28, 1
  %s30 = scalar_select %p29, %s28, 1
  %s31 = smul.addr %s30, 8
  %s32 = scalar_lea.vmem %s0, %s31
  %s33 = sadd.s32 0, 0
  %s34 = smul.u32 2, %s33
  %p35 = scmp.lt.s32.totalorder %s34, 1
  %s36 = scalar_select %p35, %s34, 1
  %s37 = smul.addr %s36, 8
  %s38 = scalar_lea.vmem %s1, %s37
  %s39 = sadd.s32 0, 0
  %s40 = smul.u32 2, %s39
  %p41 = scmp.lt.s32.totalorder %s40, 1
  %s42 = scalar_select %p41, %s40, 1
  %s43 = smul.addr %s42, 8
  %s44 = scalar_lea.vmem %s0, %s43
  %s45 = sadd.s32 0, 0
  %s46 = smul.u32 2, %s45
  %s47 = sadd.s32 0, 0
  %s48 = smul.u32 2, %s47
  %p49 = scmp.lt.s32.totalorder %s48, 1
  %s50 = scalar_select %p49, %s48, 1
  %s51 = smul.addr %s50, 8
  %s52 = scalar_lea.vmem %s1, %s51
  %s53 = sadd.s32 0, 0
  %s54 = smul.u32 2, %s53
  %p55 = scmp.eq.s32.totalorder 0, 0
  // Predicated region
  $region10: #{_dice_loss_impl.1} parent=0 // pred_check
    %p56 = pneg %p55
  $region11: #{_dice_loss_impl.1} parent=0 // pred_check_branch
    %58 = sbr.rel (%p56) target = $region13
  $region12: #{_dice_loss_impl.1} parent=0 // pred_region
    %59 = vst [vmem:[#allocation2] sm:$0xff] 0.0
    %60 = vst [vmem:[#allocation2 + $0x8] sm:$0xff] 0.0
    %61 = vst [vmem:[#allocation2 + $0x10] sm:$0xff] 0.0
  $region13: #{_dice_loss_impl.1} parent=0 // pred_fallthru
    _
  %v62 = vld [vmem:[%s44] sm:$0xff]
  %v63 = vld [vmem:[%s44 + $0x8] sm:$0xff]
  %v64 = vld [vmem:[%s52] sm:$0xff]
  %v65 = vld [vmem:[%s52 + $0x8] sm:$0xff]
  %v66 = vmul.f32 %v62, 0.5
  %v67 = vmul.f32 %v63, 0.5
  %v68 = vtanh.pop %v66
  %v69 = vtanh.pop %v67
  %v70 = vadd.f32 %v68, 1.0
  %v71 = vadd.f32 %v69, 1.0
  %v72 = vmul.f32 %v70, 0.5
  %v73 = vmul.f32 %v71, 0.5
  %v74 = vld [vmem:[#allocation2] sm:$0xff]
  %v75 = vmul.f32 %v72, %v64
  %v76 = vmul.f32 %v73, %v65
  %v77 = vadd.f32 %v75, %v76
  %v78 = vadd.f32 %v74, %v77
  %79 = vst [vmem:[#allocation2] sm:$0xff] %v78
  %s80 = scalar_lea.vmem [#allocation2], 8
  %v81 = vld [vmem:[%s80] sm:$0xff]
  %v82 = vadd.f32 %v72, %v73
  %v83 = vadd.f32 %v81, %v82
  %84 = vst [vmem:[%s80] sm:$0xff] %v83
  %s85 = scalar_lea.vmem [#allocation2], 16
  %v86 = vld [vmem:[%s85] sm:$0xff]
  %v87 = vadd.f32 %v64, %v65
  %v88 = vadd.f32 %v86, %v87
  %89 = vst [vmem:[%s85] sm:$0xff] %v88
  // Predicated region
  $region14: #{_dice_loss_impl.1} parent=0 // pred_check
    %p90 = pneg %p55
  $region15: #{_dice_loss_impl.1} parent=0 // pred_check_branch
    %92 = sbr.rel (%p90) target = $region17
  $region16: #{_dice_loss_impl.1} parent=0 // pred_region
    %v93 = vld [vmem:[#allocation2] sm:$0xff]
    %v94 = vld [vmem:[#allocation2 + $0x8] sm:$0xff]
    %v95 = vld [vmem:[#allocation2 + $0x10] sm:$0xff]
    %v96 = vrot.slane %v93, 4
    %v97 = vadd.f32 %v93, %v96
    %v98 = vrot.slane %v97, 2
    %v99 = vadd.f32 %v97, %v98
    %v100 = vrot.slane %v99, 1
    %v101 = vadd.f32 %v99, %v100
    %v102 = vrot.slane %v94, 4
    %v103 = vadd.f32 %v94, %v102
    %v104 = vrot.slane %v103, 2
    %v105 = vadd.f32 %v103, %v104
    %v106 = vrot.slane %v105, 1
    %v107 = vadd.f32 %v105, %v106
    %v108 = vrot.slane %v95, 4
    %v109 = vadd.f32 %v95, %v108
    %v110 = vrot.slane %v109, 2
    %v111 = vadd.f32 %v109, %v110
    %v112 = vrot.slane %v111, 1
    %v113 = vadd.f32 %v111, %v112
    %114 = vst [vmem:[%s2] sm:$0x1] %v101
    %115 = vst [vmem:[%s2 + $0x1] sm:$0x1] %v107
    %116 = vst [vmem:[%s2 + $0x2] sm:$0x1] %v113
  $region17: #{_dice_loss_impl.1} parent=0 // pred_fallthru
    _
  // Predicated region
  $region18: #{_dice_loss_impl.1} parent=0 // pred_check
    _
  $region19: #{_dice_loss_impl.1} parent=0 // pred_check_branch
    %118 = sbr.rel (0) target = $region21
  $region20: #{_dice_loss_impl.1} parent=0 // pred_region
    _
  $region21: #{_dice_loss_impl.1} parent=0 // pred_fallthru
    _
  // Predicated region
  $region22: #{_dice_loss_impl.1} parent=0 // pred_check
    _
  $region23: #{_dice_loss_impl.1} parent=0 // pred_check_branch
    %120 = sbr.rel (0) target = $region25
  $region24: #{_dice_loss_impl.1} parent=0 // pred_region
    _
  $region25: #{_dice_loss_impl.1} parent=0 // pred_fallthru
    _

</llo_original>
